<compile_context>
chip_gen: v7x
topology: tpu7x:2x2x1
jax: 0.10.0
libtpu: 0.0.40
codegen_flags: <defaults>
</compile_context>

<pallas_src>
import math

import jax
import jax.numpy as jnp
from jax.experimental import pallas as pl
from jax.experimental.pallas import tpu as pltpu


_TARGET_BLOCK_BYTES = 2 << 20       # ~2 MiB streaming blocks (amortize ~0.35us/step overhead)
_FUSED_BLOCK_BYTES_MAX = 4 << 20    # max per-block bytes for the fused (read-x-once) path
_FUSED_VMEM_MAX_BYTES = 44 << 20    # fused path must fit under this (v7x physical = 64 MiB)
_VMEM_HEADROOM_BYTES = 4 << 20      # slack for compiler scratch / regalloc


def _largest_divisor(n: int, cap: int, multiple: int = 1) -> int:
    """Largest d <= cap with d % multiple == 0 and n % d == 0.

    Falls back to the smallest divisor >= multiple, then to n itself (full dim)."""
    cap = max(multiple, min(cap, n))
    d = cap - (cap % multiple)
    while d >= multiple:
        if n % d == 0:
            return d
        d -= multiple
    d = multiple
    while d < n:
        if n % d == 0:
            return d
        d += 1
    return n


def _stream_tiles(rows: int, hw: int, itemsize: int):
    """Pick (tr, thw) tiles for x viewed as (rows, hw): lane-dense, ~_TARGET_BLOCK_BYTES,
    fully contiguous reads whenever a whole row fits the target block."""
    if hw * itemsize <= _TARGET_BLOCK_BYTES:
        thw = hw                                           # fully contiguous rows
    else:
        thw = _largest_divisor(hw, _TARGET_BLOCK_BYTES // itemsize, 128)
        if thw != hw and thw % 128 != 0:
            # rare non-factorable spatial size: fall back to full rows (divisibility rule)
            thw = hw
    cap_bytes = max(1, _TARGET_BLOCK_BYTES // (thw * itemsize))
    cap_par = max(8, rows // 8)                            # keep >= ~8 row steps for pipelining
    tr = _largest_divisor(rows, min(cap_bytes, cap_par), 8)
    return tr, thw


def _pass_vmem_bytes(tr: int, thw: int, itemsize: int) -> int:
    blk = tr * thw * itemsize
    return 4 * blk + 2 * tr * thw * 4 + _VMEM_HEADROOM_BYTES


# ---------------------------------------------------------------------------
# Fused single-pass kernel: mean -> k-tap channel conv -> sigmoid -> rescale
# ---------------------------------------------------------------------------
def _fused_kernel_factory(kernel_size: int, pad: int, hw_true: int):
    inv_hw = 1.0 / float(hw_true)

    def kernel(w_ref, x_ref, o_ref):
        xf = x_ref[...].astype(jnp.float32)                 # (tb, C, HW) resident slab
        y = jnp.sum(xf, axis=-1) * inv_hw                   # (tb, C) per-channel mean, f32
        c = y.shape[-1]
        # k-tap cross-correlation over the channel axis with zero padding
        # (matches PyTorch Conv1d; odd k -> symmetric pad).
        y_pad = jnp.pad(y, ((0, 0), (pad, kernel_size - 1 - pad)))
        conv = jnp.zeros_like(y)
        for j in range(kernel_size):                        # static unrolled tap loop
            conv = conv + w_ref[j] * y_pad[:, j:j + c]
        gate = jax.nn.sigmoid(conv)                         # (tb, C) f32
        # Multiply in f32 (matches the PyTorch numerics), single cast on store.
        o_ref[...] = (xf * gate[:, :, None]).astype(o_ref.dtype)

    return kernel


# ---------------------------------------------------------------------------
# Fallback pass 1: per-row (= per (b, c)) spatial sum, contiguous streaming
# ---------------------------------------------------------------------------
def _sum_kernel(x_ref, s_ref, acc_ref):
    si = pl.program_id(1)

    @pl.when(si == 0)
    def _():
        acc_ref[...] = jnp.zeros_like(acc_ref)

    acc_ref[...] += jnp.sum(x_ref[...], axis=-1, keepdims=True, dtype=jnp.float32)

    @pl.when(si == pl.num_programs(1) - 1)
    def _():
        s_ref[...] = acc_ref[...]


# ---------------------------------------------------------------------------
# Fallback pass 2: lane-dense streaming rescale on x viewed as (B*C, H*W)
# ---------------------------------------------------------------------------
def _rescale_kernel(x_ref, g_ref, o_ref):
    # Multiply in f32 (gate stays f32), cast once to the output dtype.
    o_ref[...] = (x_ref[...].astype(jnp.float32) * g_ref[...]).astype(o_ref.dtype)


def eca_block(x: jax.Array, conv_weight: jax.Array, kernel_size: int,
              *, force_two_pass: bool = False, donate_x: bool = False) -> jax.Array:
    """x: (B, C, H, W) NCHW; conv_weight: (kernel_size,) taps of the Conv1d(1,1,k) weight."""
    assert kernel_size % 2 == 1, "ECA kernel size must be odd (matches PyTorch Conv1d padding)"
    b, c, h, w = x.shape
    hw = h * w
    pad = (kernel_size - 1) // 2
    itemsize = jnp.dtype(x.dtype).itemsize
    x_bytes = b * c * hw * itemsize

    w_taps = conv_weight.reshape(-1).astype(jnp.float32)
    x3 = x.reshape(b, c, hw)                                 # contiguous: lane axis = H*W

    # ------------------ fused single-pass path (2x|x| HBM traffic) ------------------
    slab_f32 = c * hw * 4

    def fused_vmem_bytes(tb):
        blk = tb * c * hw * itemsize
        return 4 * blk + 3 * tb * slab_f32 + _VMEM_HEADROOM_BYTES

    if (not force_two_pass) and fused_vmem_bytes(1) <= _FUSED_VMEM_MAX_BYTES:
        tb_cap_bytes = max(1, _FUSED_BLOCK_BYTES_MAX // (c * hw * itemsize))
        tb_cap_par = max(1, b // 4)      # keep >= 4 batch steps when B allows (v7x: 2 TCs)
        tb = _largest_divisor(b, min(tb_cap_bytes, tb_cap_par), 1)
        while tb > 1 and fused_vmem_bytes(tb) > _FUSED_VMEM_MAX_BYTES:
            tb = _largest_divisor(b, tb - 1, 1)

        out3 = pl.pallas_call(
            _fused_kernel_factory(kernel_size, pad, hw),
            out_shape=jax.ShapeDtypeStruct((b, c, hw), x.dtype),
            grid=(b // tb,),
            in_specs=[
                # tiny conv taps live in SMEM, read as scalars inside the kernel
                pl.BlockSpec(memory_space=pltpu.MemorySpace.SMEM),
                pl.BlockSpec((tb, c, hw), lambda bi: (bi, 0, 0)),
            ],
            out_specs=pl.BlockSpec((tb, c, hw), lambda bi: (bi, 0, 0)),
            compiler_params=pltpu.CompilerParams(
                dimension_semantics=("parallel",),
                vmem_limit_bytes=int(max(fused_vmem_bytes(tb), 16 << 20)),
            ),
            cost_estimate=pl.CostEstimate(
                flops=2 * b * c * hw + b * c * (2 * kernel_size + 1),
                transcendentals=b * c,
                bytes_accessed=2 * x_bytes + kernel_size * 4,
            ),
            input_output_aliases={1: 0} if donate_x else {},
        )(w_taps, x3)
        return out3.reshape(b, c, h, w)

    # ------------------ fallback: two streaming passes over x ------------------
    rows = b * c
    x2 = x3.reshape(rows, hw)

    # pass 1: spatial sums (contiguous rows whenever a row fits the target block)
    tr1, thw1 = _stream_tiles(rows, hw, itemsize)
    sums = pl.pallas_call(
        _sum_kernel,
        out_shape=jax.ShapeDtypeStruct((rows, 1), jnp.float32),
        grid=(rows // tr1, hw // thw1),
        in_specs=[pl.BlockSpec((tr1, thw1), lambda r, s: (r, s))],
        out_specs=pl.BlockSpec((tr1, 1), lambda r, s: (r, 0)),
        scratch_shapes=[pltpu.VMEM((tr1, 1), jnp.float32)],
        compiler_params=pltpu.CompilerParams(
            dimension_semantics=("parallel", "arbitrary"),
            vmem_limit_bytes=int(max(_pass_vmem_bytes(tr1, thw1, itemsize), 16 << 20)),
        ),
        cost_estimate=pl.CostEstimate(
            flops=rows * hw, transcendentals=0, bytes_accessed=x_bytes + rows * 4),
    )(x2)

    # tiny O(B*C*k) channel conv + sigmoid: negligible, leave to plain JAX/XLA
    mean = sums.reshape(b, c) * (1.0 / float(hw))
    y_pad = jnp.pad(mean, ((0, 0), (pad, kernel_size - 1 - pad)))
    convd = jnp.zeros_like(mean)
    for j in range(kernel_size):
        convd = convd + w_taps[j] * y_pad[:, j:j + c]
    gate = jax.nn.sigmoid(convd).reshape(rows, 1)            # (B*C, 1) f32

    # pass 2: tiled rescale (second H*W tile axis keeps blocks bounded for huge spatial sizes)
    tr2, thw2 = _stream_tiles(rows, hw, itemsize)
    out2 = pl.pallas_call(
        _rescale_kernel,
        out_shape=jax.ShapeDtypeStruct((rows, hw), x.dtype),
        grid=(rows // tr2, hw // thw2),
        in_specs=[
            pl.BlockSpec((tr2, thw2), lambda r, s: (r, s)),
            pl.BlockSpec((tr2, 1), lambda r, s: (r, 0)),
        ],
        out_specs=pl.BlockSpec((tr2, thw2), lambda r, s: (r, s)),
        compiler_params=pltpu.CompilerParams(
            dimension_semantics=("parallel", "parallel"),
            vmem_limit_bytes=int(max(_pass_vmem_bytes(tr2, thw2, itemsize), 16 << 20)),
        ),
        cost_estimate=pl.CostEstimate(
            flops=rows * hw, transcendentals=0, bytes_accessed=2 * x_bytes + rows * 4),
        input_output_aliases={0: 0} if donate_x else {},
    )(x2, gate)

    return out2.reshape(b, c, h, w)


def eca_reference(x, conv_weight, kernel_size):
    """Pure-JAX reference matching the PyTorch forward."""
    b, c, _, _ = x.shape
    pad = (kernel_size - 1) // 2
    y = jnp.mean(x.astype(jnp.float32), axis=(2, 3))             # (B, C)
    y_pad = jnp.pad(y, ((0, 0), (pad, kernel_size - 1 - pad)))   # (B, C+k-1)
    acc = jnp.zeros_like(y)
    for j in range(kernel_size):
        acc = acc + conv_weight[j] * y_pad[:, j:j + c]
    gate = jax.nn.sigmoid(acc)
    return (x.astype(jnp.float32) * gate[:, :, None, None]).astype(x.dtype)


if __name__ == "__main__":
    B, C, H, W = 2, 16, 8, 8
    gamma, bias_b = 2, 1

    # Same kernel-size rule as the PyTorch __init__ (C=16 -> k=3, non-trivial conv).
    ksize = int(abs(math.log(C, 2) + bias_b) / gamma)
    ksize = ksize if ksize % 2 == 1 else ksize + 1

    key = jax.random.PRNGKey(0)
    kx, kw = jax.random.split(key)
    x = jax.random.normal(kx, (B, C, H, W), dtype=jnp.float32)
    conv_weight = jax.random.normal(kw, (ksize,), dtype=jnp.float32) * 0.5

    ref = eca_reference(x, conv_weight, ksize)

    # default = fused single-pass path
    out_fused = jax.block_until_ready(eca_block(x, conv_weight, ksize))
    assert out_fused.shape == x.shape
    assert jnp.allclose(out_fused, ref, atol=1e-5, rtol=1e-5), "fused path mismatch vs reference"

    # exercise the large-C*HW two-pass fallback as well
    out_2pass = jax.block_until_ready(eca_block(x, conv_weight, ksize, force_two_pass=True))
    assert jnp.allclose(out_2pass, ref, atol=1e-5, rtol=1e-5), "two-pass path mismatch vs reference"

    print("KERNEL_OK")
</pallas_src>

<mosaic_0001>
module attributes {stable_mosaic.version = 11 : i64} {
  func.func @kernel(%arg0: i32, %arg1: memref<3xf32, #tpu.memory_space<smem>>, %arg2: memref<1x16x64xf32, #tpu.memory_space<vmem>>, %arg3: memref<1x16x64xf32, #tpu.memory_space<vmem>>) attributes {dimension_semantics = [#tpu.dimension_semantics<parallel>], iteration_bounds = array<i64: 2>, scalar_prefetch = 0 : i64, scratch_operands = 0 : i64, tpu.core_type = #tpu.core_type<tc>, window_params = [{transform_indices = @transform_0, window_bounds = array<i64: 3>}, {transform_indices = @transform_1, window_bounds = array<i64: 1, 16, 64>}, {transform_indices = @transform_2, window_bounds = array<i64: 1, 16, 64>}]} {
    %c0 = arith.constant 0 : index
    %c0_0 = arith.constant 0 : index
    %c0_1 = arith.constant 0 : index
    %0 = vector.load %arg2[%c0, %c0_0, %c0_1] : memref<1x16x64xf32, #tpu.memory_space<vmem>>, vector<1x16x64xf32>
    %cst = arith.constant dense<0.000000e+00> : vector<1x16xf32>
    %1 = vector.multi_reduction <add>, %0, %cst [2] : vector<1x16x64xf32> to vector<1x16xf32>
    %cst_2 = arith.constant 1.562500e-02 : f32
    %2 = vector.broadcast %cst_2 : f32 to vector<1x16xf32>
    %3 = arith.mulf %1, %2 : vector<1x16xf32>
    %c0_i32 = arith.constant 0 : i32
    %4 = arith.sitofp %c0_i32 : i32 to f32
    %5 = vector.broadcast %4 : f32 to vector<1x1xf32>
    %6 = tpu.concatenate %5, %3 in 1 : vector<1x1xf32>, vector<1x16xf32> -> vector<1x17xf32>
    %7 = vector.broadcast %4 : f32 to vector<1x1xf32>
    %8 = tpu.concatenate %6, %7 in 1 : vector<1x17xf32>, vector<1x1xf32> -> vector<1x18xf32>
    %cst_3 = arith.constant 0.000000e+00 : f32
    %9 = vector.broadcast %cst_3 : f32 to vector<1x16xf32>
    %c0_4 = arith.constant 0 : index
    %10 = memref.load %arg1[%c0_4] : memref<3xf32, #tpu.memory_space<smem>>
    %11 = vector.extract_strided_slice %8 {offsets = [0, 0], sizes = [1, 16], strides = [1, 1]} : vector<1x18xf32> to vector<1x16xf32>
    %12 = vector.broadcast %10 : f32 to vector<1x16xf32>
    %13 = arith.mulf %12, %11 : vector<1x16xf32>
    %14 = arith.addf %9, %13 : vector<1x16xf32>
    %c1 = arith.constant 1 : index
    %15 = memref.load %arg1[%c1] : memref<3xf32, #tpu.memory_space<smem>>
    %16 = vector.extract_strided_slice %8 {offsets = [0, 1], sizes = [1, 16], strides = [1, 1]} : vector<1x18xf32> to vector<1x16xf32>
    %17 = vector.broadcast %15 : f32 to vector<1x16xf32>
    %18 = arith.mulf %17, %16 : vector<1x16xf32>
    %19 = arith.addf %14, %18 : vector<1x16xf32>
    %c2 = arith.constant 2 : index
    %20 = memref.load %arg1[%c2] : memref<3xf32, #tpu.memory_space<smem>>
    %21 = vector.extract_strided_slice %8 {offsets = [0, 2], sizes = [1, 16], strides = [1, 1]} : vector<1x18xf32> to vector<1x16xf32>
    %22 = vector.broadcast %20 : f32 to vector<1x16xf32>
    %23 = arith.mulf %22, %21 : vector<1x16xf32>
    %24 = arith.addf %19, %23 : vector<1x16xf32>
    %25 = arith.negf %24 : vector<1x16xf32>
    %26 = math.exp %25 : vector<1x16xf32>
    %cst_5 = arith.constant 1.000000e+00 : f32
    %27 = vector.broadcast %cst_5 : f32 to vector<1x16xf32>
    %28 = arith.addf %27, %26 : vector<1x16xf32>
    %29 = arith.divf %27, %28 : vector<1x16xf32>
    %30 = vector.shape_cast %29 : vector<1x16xf32> to vector<1x16x1xf32>
    %31 = vector.broadcast %30 : vector<1x16x1xf32> to vector<1x16x64xf32>
    %32 = arith.mulf %0, %31 : vector<1x16x64xf32>
    %c0_6 = arith.constant 0 : index
    %c0_7 = arith.constant 0 : index
    %c0_8 = arith.constant 0 : index
    %33 = vector.load %arg3[%c0_6, %c0_7, %c0_8] : memref<1x16x64xf32, #tpu.memory_space<vmem>>, vector<1x16x64xf32>
    tpu.vector_store %arg3[%c0_6, %c0_7, %c0_8], %32 {strides = array<i32>} : memref<1x16x64xf32, #tpu.memory_space<vmem>>, vector<1x16x64xf32>,
    return
  }
  func.func @transform_0(%arg0: i32) -> i32 {
    %c0_i32 = arith.constant 0 : i32
    %c0_i32_0 = arith.constant 0 : i32
    return %c0_i32 : i32
  }
  func.func @transform_1(%arg0: i32) -> (i32, i32, i32) {
    %c0_i32 = arith.constant 0 : i32
    %c0_i32_0 = arith.constant 0 : i32
    %c0_i32_1 = arith.constant 0 : i32
    return %arg0, %c0_i32, %c0_i32_0 : i32, i32, i32
  }
  func.func @transform_2(%arg0: i32) -> (i32, i32, i32) {
    %c0_i32 = arith.constant 0 : i32
    %c0_i32_0 = arith.constant 0 : i32
    %c0_i32_1 = arith.constant 0 : i32
    return %arg0, %c0_i32, %c0_i32_0 : i32, i32, i32
  }
}

</mosaic_0001>

<llo_original>
// kernel: tpu_custom_call.1
$region0: #{tpu_custom_call.1}
  #allocation0 [shape = 'u32[]', space=smem, size = 0x4, offset = 0x4, fixed_abs, tag = 'smem constant byte address 0x4 - core index']
  #allocation1 [shape = 'u32[144,128]{1,0:T(1,128)}', space=vmem, size = 0x12000, scoped, tag = 'internal scratch']
  %s0 = inlined_call_operand.hbm [shape: f32[3], index: 0, kind: input, shape index: {}]
  %s1 = inlined_call_operand.hbm [shape: f32[2,16,64], index: 1, kind: input, shape index: {}]
  %s2 = inlined_call_operand.hbm [shape: f32[2,16,64], index: 2, kind: output, shape index: {}]
  %s3 = sld [smem:[#allocation0]]
  $region49: #{tpu_custom_call.1} parent=0
    _
  %s5 = ssub.s32 1, %s3
  %s6 = scalar_select 0, %s5, %s3
  $region1: #{tpu_custom_call.1} parent=0
    #allocation2 [shape = 'u8[512]{0}', space=smem, size = 0x200, scoped, tag = 'input window, operand 0, single buffered']
    #allocation3 [shape = 's32[2]{0}', space=sflag, size = 0x8, scoped, tag = 'scoped memory for tpu_custom_call.1']
    #allocation4 [shape = 's32[2]{0}', space=sflag, size = 0x8, scoped, tag = 'scoped memory for tpu_custom_call.1']
    #allocation5 [shape = 's32[2]{0}', space=sflag, size = 0x8, scoped, tag = 'scoped memory for tpu_custom_call.1']
    #allocation6 [shape = 'u8[16384]{0}', space=vmem, size = 0x4000, scoped, tag = 'input window, operand 1']
    #allocation7 [shape = 'u8[16384]{0}', space=vmem, size = 0x4000, scoped, tag = 'output window, operand 0']
    %7 = vsyncpa [#allocation5], 0
    %8 = vsyncpa [#allocation3], 0
    %s9 = scalar_lea.sflag [#allocation3], 1
    %10 = vsyncpa %s9, 0
    %11 = vsyncpa [#allocation4], 0
    %s12 = scalar_lea.sflag [#allocation4], 1
    %13 = vsyncpa %s12, 0
    loop: start=0, step=1, limit=4
    $region2: #{tpu_custom_call.1} parent=1 // loop_pre_header
      _
    $region3: #{tpu_custom_call.1} parent=1 // loop_header
      %s15 = sphi 0, %s19
      %p16 = scmp.ge.s32.totalorder %s15, 4
      %s23 = sphi 0, %s23
      %s25 = sphi 0, %s23
      %s26 = sphi 0, %s25
      %s40 = sphi 0, %s26
      %s46 = sphi 0, %s48
      %s49 = sphi 0, %s46
      %s50 = sphi 0, %s49
      %s66 = sphi 0, %s50
      %s72 = sphi 0, %s74
      %s75 = sphi 0, %s72
      %s76 = sphi 0, %s75
      %s92 = sphi 0, %s76
    $region4: #{tpu_custom_call.1} parent=1 // loop_header_branch
      %18 = sbr.rel (%p16) target = $region8
    $region5: #{tpu_custom_call.1} parent=1 // loop_body
      %s20 = ssub.s32 %s15, 1
      %s21 = ssub.s32 %s15, 2
      %s22 = sadd.s32 %s15, 1
      %s24 = sadd.s32 %s23, 1
      %p27 = scmp.eq.s32.totalorder %s15, 1
      %p28 = scmp.ne.s32.totalorder %s23, %s25
      %p29 = scmp.eq.s32.totalorder %s15, 0
      %p30 = por %p28, %p29
      %p31 = scmp.ne.s32.totalorder %s23, %s25
      %p32 = scmp.eq.s32.totalorder %s20, 1
      %p33 = por %p31, %p32
      %p34 = scmp.ne.s32.totalorder %s25, %s26
      %p35 = scmp.eq.s32.totalorder %s20, 0
      %p36 = por %p34, %p35
      %p37 = scmp.ne.s32.totalorder %s25, %s26
      %p38 = scmp.eq.s32.totalorder %s21, 1
      %p39 = por %p37, %p38
      %p41 = scmp.ne.s32.totalorder %s26, %s40
      %p42 = scmp.eq.s32.totalorder %s21, 0
      %p43 = por %p41, %p42
      %s44 = ssub.s32 %s15, %s22
      %p45 = scmp.eq.s32.totalorder %s44, 0
      %s47 = sadd.s32 %s46, 1
      %s48 = scalar_select %p45, %s46, %s47
      %p51 = pneg %p45
      %p52 = scmp.eq.s32.totalorder %s15, 1
      %p53 = por %p51, %p52
      %p54 = scmp.ne.s32.totalorder %s46, %s49
      %p55 = scmp.eq.s32.totalorder %s15, 0
      %p56 = por %p54, %p55
      %p57 = scmp.ne.s32.totalorder %s46, %s49
      %p58 = scmp.eq.s32.totalorder %s20, 1
      %p59 = por %p57, %p58
      %p60 = scmp.ne.s32.totalorder %s49, %s50
      %p61 = scmp.eq.s32.totalorder %s20, 0
      %p62 = por %p60, %p61
      %p63 = scmp.ne.s32.totalorder %s49, %s50
      %p64 = scmp.eq.s32.totalorder %s21, 1
      %p65 = por %p63, %p64
      %p67 = scmp.ne.s32.totalorder %s50, %s66
      %p68 = scmp.eq.s32.totalorder %s21, 0
      %p69 = por %p67, %p68
      %s70 = ssub.s32 %s15, %s22
      %p71 = scmp.eq.s32.totalorder %s70, 0
      %s73 = sadd.s32 %s72, 1
      %s74 = scalar_select %p71, %s72, %s73
      %p77 = pneg %p71
      %p78 = scmp.eq.s32.totalorder %s15, 1
      %p79 = por %p77, %p78
      %p80 = scmp.ne.s32.totalorder %s72, %s75
      %p81 = scmp.eq.s32.totalorder %s15, 0
      %p82 = por %p80, %p81
      %p83 = scmp.ne.s32.totalorder %s72, %s75
      %p84 = scmp.eq.s32.totalorder %s20, 1
      %p85 = por %p83, %p84
      %p86 = scmp.ne.s32.totalorder %s75, %s76
      %p87 = scmp.eq.s32.totalorder %s20, 0
      %p88 = por %p86, %p87
      %p89 = scmp.ne.s32.totalorder %s75, %s76
      %p90 = scmp.eq.s32.totalorder %s21, 1
      %p91 = por %p89, %p90
      %p93 = scmp.ne.s32.totalorder %s76, %s92
      %p94 = scmp.eq.s32.totalorder %s21, 0
      %p95 = por %p93, %p94
      %p96 = scmp.le.s32.totalorder 1, %s15
      %p97 = scmp.lt.s32.totalorder %s15, 3
      %p98 = pnand %p96, %p97
      %p99 = pneg %p98
      // Predicated region
      $region9: #{tpu_custom_call.1} parent=5 // pred_check
        _
      $region10: #{tpu_custom_call.1} parent=5 // pred_check_branch
        %101 = sbr.rel (%p98) target = $region12
      $region11: #{tpu_custom_call.1} parent=5 // pred_region
        %s102 = ssub.s32 %s15, 1
        // Predicated region
        $region13: #{tpu_custom_call.1} parent=11 // pred_check
          %p103 = pneg %p36
        $region14: #{tpu_custom_call.1} parent=11 // pred_check_branch
          %105 = sbr.rel (%p103) target = $region16
        $region15: #{tpu_custom_call.1} parent=11 // pred_region
          %s107 = ssub.s32 16, 16
          %108 = vsyncadd [#allocation5], %s107
          %111 = dma.hbm_to_smem %s0, 16, [#allocation2], [#allocation5]
        $region16: #{tpu_custom_call.1} parent=11 // pred_fallthru
          _
      $region12: #{tpu_custom_call.1} parent=5 // pred_fallthru
        _
      %p112 = scmp.lt.s32.totalorder %s15, 2
      // Predicated region
      $region17: #{tpu_custom_call.1} parent=5 // pred_check
        %p113 = pneg %p112
      $region18: #{tpu_custom_call.1} parent=5 // pred_check_branch
        %115 = sbr.rel (%p113) target = $region20
      $region19: #{tpu_custom_call.1} parent=5 // pred_region
        // Predicated region
        $region21: #{tpu_custom_call.1} parent=19 // pred_check
          %p116 = pneg %p56
        $region22: #{tpu_custom_call.1} parent=19 // pred_check_branch
          %118 = sbr.rel (%p116) target = $region24
        $region23: #{tpu_custom_call.1} parent=19 // pred_region
          %s119 = sand.u32 %s46, 1
          %s120 = scalar_lea.sflag [#allocation3], %s119
          %s121 = sand.u32 %s46, 1
          %s122 = smul.addr %s121, 16
          %s123 = scalar_lea.vmem [#allocation6], %s122
          %s125 = ssub.s32 256, 256
          %126 = vsyncadd %s120, %s125
          %s127 = smul.addr %s15, 2
          %s128 = smul.addr %s127, 128
          %s129 = scalar_lea.hbm %s1, %s128
          %s130 = sshll.u32 %s123, 4
          %s131 = int_to_ptr.vmem [resolvable:$true] %s130
          %136 = dma.hbm_to_vmem [thread:$0]  %s129, 256, %s131, %s120, 128, 128, 8
        $region24: #{tpu_custom_call.1} parent=19 // pred_fallthru
          _
      $region20: #{tpu_custom_call.1} parent=5 // pred_fallthru
        _
      %p137 = scmp.le.s32.totalorder 1, %s15
      %p138 = scmp.lt.s32.totalorder %s15, 3
      %p139 = pnand %p137, %p138
      %p140 = pneg %p139
      // Predicated region
      $region25: #{tpu_custom_call.1} parent=5 // pred_check
        _
      $region26: #{tpu_custom_call.1} parent=5 // pred_check_branch
        %142 = sbr.rel (%p139) target = $region28
      $region27: #{tpu_custom_call.1} parent=5 // pred_region
        %s143 = ssub.s32 %s15, 1
        // Predicated region
        $region29: #{tpu_custom_call.1} parent=27 // pred_check
          %p144 = pneg %p36
        $region30: #{tpu_custom_call.1} parent=27 // pred_check_branch
          %146 = sbr.rel (%p144) target = $region32
        $region31: #{tpu_custom_call.1} parent=27 // pred_region
          %147 = dma.done [#allocation5], 16
        $region32: #{tpu_custom_call.1} parent=27 // pred_fallthru
          _
        %s148 = sand.u32 %s49, 1
        %s149 = scalar_lea.sflag [#allocation3], %s148
        %s150 = sand.u32 %s49, 1
        %s151 = smul.addr %s150, 16
        %s152 = scalar_lea.vmem [#allocation6], %s151
        // Predicated region
        $region33: #{tpu_custom_call.1} parent=27 // pred_check
          %p153 = pneg %p62
        $region34: #{tpu_custom_call.1} parent=27 // pred_check_branch
          %155 = sbr.rel (%p153) target = $region36
        $region35: #{tpu_custom_call.1} parent=27 // pred_region
          %156 = dma.done %s149, 256
        $region36: #{tpu_custom_call.1} parent=27 // pred_fallthru
          _
        %157 = sfence
        %p158 = pneg %p36
        %p159 = pneg %p33
        %s160 = sand.u32 %s49, 1
        %s161 = scalar_lea.sflag [#allocation3], %s160
        %s162 = sand.u32 %s49, 1
        %s163 = smul.addr %s162, 16
        %s164 = scalar_lea.vmem [#allocation6], %s163
        %p165 = pneg %p62
        %p166 = pneg %p59
        %p167 = pneg %p88
        %p168 = pneg %p85
        %s169 = sand.u32 %s75, 1
        %s170 = scalar_lea.sflag [#allocation4], %s169
        %s171 = sand.u32 %s75, 1
        %s172 = smul.addr %s171, 16
        %s173 = scalar_lea.vmem [#allocation7], %s172
        %v174 = vld [vmem:[%s152] sm:$0xff]
        %v175 = vld [vmem:[%s152 + $0x8] sm:$0xff]
        %vm176 = vcmask 523264
        %v177 = vsel %vm176, %v174, 0.0
        %178 = vadd.xlane.f32.xlu0 %v177
        %v179 = vpop.xlane.xlu0 %178
        %v180 = vsel %vm176, %v175, 0.0
        %181 = vadd.xlane.f32.xlu0 %v180
        %v182 = vpop.xlane.xlu0 %181
        %v183 = vmul.f32 %v179, 0.015625
        %v184 = vmul.f32 %v182, 0.015625
        %v187 = vlaneseq
        %v188 = vand.u32 %v187, 127
        %v189 = vadd.s32 %v188, 4294967295
        %v190 = vlaneseq
        %v191 = vshrl.u32 %v190, 7
        %v192 = vsub.s32 %v189, %v191
        %v193 = vrot.slane %v183, %v192
        %v194 = vadd.s32 %v188, 4294967287
        %v195 = vlaneseq
        %v196 = vshrl.u32 %v195, 7
        %v197 = vsub.s32 %v194, %v196
        %v198 = vrot.slane %v184, %v197
        %vm199 = vcmask 138312
        %v200 = vsel %vm199, %v198, %v193
        %vm202 = vcmask 7168
        %v203 = vsel %vm202, 0.0, %v200
        %vm204 = vcmask 138240
        %v205 = vsel %vm204, %v203, 0.0
        %s206 = sld [smem:[#allocation2]]
        %v207 = vstv %s206
        %v208 = vmul.f32 %v207, %v205
        %v209 = vadd.f32 %v208, 0.0
        %s210 = sld [smem:[#allocation2 + $0x1]]
        %v211 = vstv %s210
        %v212 = vmul.f32 %v211, %v205
        %214 = vrot.lane.b32.xlu0 %v212, 127
        %v215 = vpop.permute.xlu0 %214
        %v217 = vadd.f32 %v209, %v215
        %s218 = sld [smem:[#allocation2 + $0x2]]
        %v219 = vstv %s218
        %v220 = vmul.f32 %v219, %v205
        %222 = vrot.lane.b32.xlu0 %v220, 126
        %v223 = vpop.permute.xlu0 %222
        %v225 = vadd.f32 %v217, %v223
        %v226 = vxor.u32 %v225, 2147483648
        %v227 = vmul.f32 %v226, 1.442695
        %v228 = vpow.pop %v227
        %v229 = vadd.f32 %v228, 1.0
        %v230 = vrcp.pop %v229
        %v231 = vmul.f32 1.0, %v230
        %v232 = vlaneseq
        %v233 = vshrl.u32 %v232, 7
        %v234 = vsub.s32 0, %v233
        %v235 = vrot.slane %v231, %v234
        %237 = vbcast.lane.b32.xlu0 %v235, 256
        %v238 = vpop.permute.xlu0 %237
        %s240 = sor.u32 256, 8
        %241 = vbcast.lane.b32.xlu0 %v235, %s240
        %v242 = vpop.permute.xlu0 %241
        %v243 = vmul.f32 %v174, %v238
        %v244 = vmul.f32 %v175, %v242
        %245 = vst.msk [vmem:[%s173] sm:$0xff] %vm176, %v243
        %246 = vst.msk [vmem:[%s173 + $0x8] sm:$0xff] %vm176, %v244
        %s247 = sand.u32 %s75, 1
        %s248 = scalar_lea.sflag [#allocation4], %s247
        %s249 = sand.u32 %s75, 1
        %s250 = smul.addr %s249, 16
        %s251 = scalar_lea.vmem [#allocation7], %s250
        // Predicated region
        $region37: #{tpu_custom_call.1} parent=27 // pred_check
          %p252 = pneg %p85
        $region38: #{tpu_custom_call.1} parent=27 // pred_check_branch
          %254 = sbr.rel (%p252) target = $region40
        $region39: #{tpu_custom_call.1} parent=27 // pred_region
          %s256 = ssub.s32 256, 256
          %257 = vsyncadd %s248, %s256
          %s258 = smul.addr %s20, 2
          %s259 = smul.addr %s258, 128
          %s260 = scalar_lea.hbm %s2, %s259
          %s261 = sshll.u32 %s251, 4
          %s262 = int_to_ptr.vmem [resolvable:$true] %s261
          %267 = dma.vmem_to_hbm [thread:$0]  %s262, 256, %s260, %s248, 128, 128, 8
        $region40: #{tpu_custom_call.1} parent=27 // pred_fallthru
          _
      $region28: #{tpu_custom_call.1} parent=5 // pred_fallthru
        _
      %p268 = scmp.le.s32.totalorder 2, %s15
      // Predicated region
      $region41: #{tpu_custom_call.1} parent=5 // pred_check
        %p269 = pneg %p268
      $region42: #{tpu_custom_call.1} parent=5 // pred_check_branch
        %271 = sbr.rel (%p269) target = $region44
      $region43: #{tpu_custom_call.1} parent=5 // pred_region
        %s272 = ssub.s32 %s15, 2
        // Predicated region
        $region45: #{tpu_custom_call.1} parent=43 // pred_check
          %p273 = pneg %p91
        $region46: #{tpu_custom_call.1} parent=43 // pred_check_branch
          %275 = sbr.rel (%p273) target = $region48
        $region47: #{tpu_custom_call.1} parent=43 // pred_region
          %s276 = sand.u32 %s76, 1
          %s277 = scalar_lea.sflag [#allocation4], %s276
          %s278 = sand.u32 %s76, 1
          %s279 = smul.addr %s278, 16
          %s280 = scalar_lea.vmem [#allocation7], %s279
          %281 = dma.done %s277, 256
        $region48: #{tpu_custom_call.1} parent=43 // pred_fallthru
          _
      $region44: #{tpu_custom_call.1} parent=5 // pred_fallthru
        _
    $region6: #{tpu_custom_call.1} parent=1 // loop_footer
      %s19 = sadd.s32 1, %s15
    $region7: #{tpu_custom_call.1} parent=1 // loop_footer_branch
      %14 = sbr.rel target = $region3
    $region8: #{tpu_custom_call.1} parent=1 // loop_exit
      _
    %282 = vsyncpa [#allocation3], 1
    %s283 = scalar_lea.sflag [#allocation3], 1
    %284 = vsyncpa %s283, 1
    %285 = vsyncpa [#allocation4], 1
    %s286 = scalar_lea.sflag [#allocation4], 1
    %287 = vsyncpa %s286, 1
    %288 = vsyncpa [#allocation5], 1
    %s289 = scalar_lea.sflag [#allocation5], 1
    %290 = vsyncpa %s289, 1

</llo_original>
